<compile_context>
chip_gen: v7x
topology: tpu7x:2x2x1
jax: 0.10.0
libtpu: 0.0.40
codegen_flags: <defaults>
</compile_context>

<pallas_src>
import math

import jax
import jax.numpy as jnp
from jax.experimental import pallas as pl
from jax.experimental.pallas import tpu as pltpu


def _posenc_kernel(x_ref, enc_ref, o_ref):
    # x_ref: (B, tn), enc_ref: (1, tn) -> broadcast add over the batch dim.
    o_ref[...] = x_ref[...] + enc_ref[...]
    # TODO(synk): dropout omitted (eval-mode identity); training-mode dropout
    # would need pltpu.prng_seed/prng_random_bits for an in-kernel mask.


def make_sinusoidal_encoding(max_seq_len, d_embed, dtype=jnp.float32):
    """Exactly mirrors the PyTorch __init__ buffer construction."""
    positions = jnp.arange(max_seq_len, dtype=jnp.float32)[:, None]          # (L, 1)
    denominators = jnp.exp(
        jnp.arange(0, d_embed, 2, dtype=jnp.float32) * (math.log(1e-4) / d_embed)
    )[None, :]                                                                # (1, ceil(d/2))
    enc_mat = positions * denominators                                        # (L, ceil(d/2))
    enc = jnp.zeros((max_seq_len, d_embed), jnp.float32)
    enc = enc.at[:, 0::2].set(jnp.sin(enc_mat))
    enc = enc.at[:, 1::2].set(jnp.cos(enc_mat[:, : d_embed // 2]))
    return enc.astype(dtype)


def _choose_lane_tile(N, B, itemsize,
                      target_block_bytes=2 << 20,    # ~2 MiB per x/out block
                      vmem_budget_bytes=24 << 20):   # <= ~24 MiB double-buffered (v7x-safe)
    """Lane tile (multiple of 128) over the flattened S*D axis."""
    tn = max(128, (target_block_bytes // (B * itemsize)) // 128 * 128)
    # Total pipelined VMEM ~ 2 buffers * (x + out + enc) blocks.
    cap = vmem_budget_bytes // (2 * (2 * B + 1) * itemsize)
    tn = min(tn, max(128, cap // 128 * 128))
    tn = min(tn, pl.cdiv(N, 128) * 128)            # never bigger than (rounded-up) N
    if pl.cdiv(N, tn) < 2:                         # keep >=2 grid steps for v7x megacore
        tn = max(128, pl.cdiv(pl.cdiv(N, 2), 128) * 128)
    return tn


def sinusoidal_positional_encoding(x, encoding):
    """x: (B, S, d_embed). encoding: (max_seq_len, d_embed). Returns (B, S, d_embed)."""
    B, S, D = x.shape
    L, De = encoding.shape
    assert De == D and S <= L, "encoding must cover the token dimension"

    N = S * D
    # Free layout changes (contiguous reshapes are bitcasts): no pad, no slice of x/out.
    x2 = x.reshape(B, N)
    enc2 = encoding[:S].astype(x.dtype).reshape(1, N)   # tiny (S*D) slice+cast, done once

    itemsize = jnp.dtype(x.dtype).itemsize
    tn = _choose_lane_tile(N, B, itemsize)
    grid = (pl.cdiv(N, tn),)                       # partial boundary block handled by Pallas

    out = pl.pallas_call(
        _posenc_kernel,
        out_shape=jax.ShapeDtypeStruct((B, N), x.dtype),
        grid_spec=pltpu.PrefetchScalarGridSpec(
            num_scalar_prefetch=0,
            grid=grid,
            in_specs=[
                pl.BlockSpec((B, tn), lambda j: (0, j)),   # activations (full batch / step)
                pl.BlockSpec((1, tn), lambda j: (0, j)),   # encoding (read once in total)
            ],
            out_specs=pl.BlockSpec((B, tn), lambda j: (0, j)),
        ),
        compiler_params=pltpu.CompilerParams(
            dimension_semantics=("parallel",),
            vmem_limit_bytes=32 * 1024 * 1024,
        ),
        cost_estimate=pl.CostEstimate(
            flops=B * N,                                   # one add per element
            transcendentals=0,
            bytes_accessed=(2 * B * N + N) * itemsize,     # read x + enc, write out
        ),
        # x is dead after the add; output reuses its buffer when the caller donates x.
        input_output_aliases={0: 0},
    )(x2, enc2)

    return out.reshape(B, S, D)


if __name__ == "__main__":
    # Small shapes consistent with the module defaults.
    B, S, d_embed, max_seq_len = 2, 8, 32, 512

    key = jax.random.PRNGKey(0)
    x = jax.random.normal(key, (B, S, d_embed), dtype=jnp.float32)

    encoding = make_sinusoidal_encoding(max_seq_len, d_embed)

    # Reference (dropout is eval-mode identity). Computed before the kernel so the
    # check is independent of any buffer aliasing.
    ref = x + encoding[None, :S, :]

    out = sinusoidal_positional_encoding(x, encoding)
    out = jax.block_until_ready(out)

    assert out.shape == (B, S, d_embed)
    assert jnp.allclose(out, ref, atol=1e-6, rtol=1e-6), "mismatch vs reference"

    print("KERNEL_OK")
</pallas_src>

<mosaic_0001>
module attributes {stable_mosaic.version = 11 : i64} {
  func.func @_posenc_kernel(%arg0: i32, %arg1: memref<2x128xf32, #tpu.memory_space<vmem>>, %arg2: memref<1x128xf32, #tpu.memory_space<vmem>>, %arg3: memref<2x128xf32, #tpu.memory_space<vmem>>) attributes {dimension_semantics = [#tpu.dimension_semantics<parallel>], iteration_bounds = array<i64: 2>, scalar_prefetch = 0 : i64, scratch_operands = 0 : i64, tpu.core_type = #tpu.core_type<tc>, window_params = [{transform_indices = @transform_0, window_bounds = array<i64: 2, 128>}, {transform_indices = @transform_1, window_bounds = array<i64: 1, 128>}, {transform_indices = @transform_2, window_bounds = array<i64: 2, 128>}]} {
    %c0 = arith.constant 0 : index
    %c0_0 = arith.constant 0 : index
    %0 = vector.load %arg1[%c0, %c0_0] : memref<2x128xf32, #tpu.memory_space<vmem>>, vector<2x128xf32>
    %c0_1 = arith.constant 0 : index
    %c0_2 = arith.constant 0 : index
    %1 = vector.load %arg2[%c0_1, %c0_2] : memref<1x128xf32, #tpu.memory_space<vmem>>, vector<1x128xf32>
    %2 = vector.broadcast %1 : vector<1x128xf32> to vector<2x128xf32>
    %3 = arith.addf %0, %2 : vector<2x128xf32>
    %c0_3 = arith.constant 0 : index
    %c0_4 = arith.constant 0 : index
    %4 = vector.load %arg3[%c0_3, %c0_4] : memref<2x128xf32, #tpu.memory_space<vmem>>, vector<2x128xf32>
    tpu.vector_store %arg3[%c0_3, %c0_4], %3 {strides = array<i32>} : memref<2x128xf32, #tpu.memory_space<vmem>>, vector<2x128xf32>,
    return
  }
  func.func @transform_0(%arg0: i32) -> (i32, i32) {
    %c0_i32 = arith.constant 0 : i32
    %c0_i32_0 = arith.constant 0 : i32
    return %c0_i32, %arg0 : i32, i32
  }
  func.func @transform_1(%arg0: i32) -> (i32, i32) {
    %c0_i32 = arith.constant 0 : i32
    %c0_i32_0 = arith.constant 0 : i32
    return %c0_i32, %arg0 : i32, i32
  }
  func.func @transform_2(%arg0: i32) -> (i32, i32) {
    %c0_i32 = arith.constant 0 : i32
    %c0_i32_0 = arith.constant 0 : i32
    return %c0_i32, %arg0 : i32, i32
  }
}

</mosaic_0001>

<llo_original>
// kernel: tpu_custom_call.1
$region0: #{tpu_custom_call.1}
  #allocation0 [shape = 'u32[]', space=smem, size = 0x4, offset = 0x4, fixed_abs, tag = 'smem constant byte address 0x4 - core index']
  #allocation1 [shape = 'u32[144,128]{1,0:T(1,128)}', space=vmem, size = 0x12000, scoped, tag = 'internal scratch']
  %s0 = inlined_call_operand.hbm [shape: f32[2,256], index: 0, kind: input, shape index: {}, may-alias: {0,2}]
  %s1 = inlined_call_operand.vmem [shape: f32[1,256], index: 1, kind: input, shape index: {}]
  %s2 = inlined_call_operand.hbm [shape: f32[2,256], index: 2, kind: output, shape index: {}, may-alias: {0,2}]
  %s3 = sld [smem:[#allocation0]]
  $region45: #{tpu_custom_call.1} parent=0
    _
  %s5 = ssub.s32 1, %s3
  %s6 = scalar_select 0, %s5, %s3
  $region1: #{tpu_custom_call.1} parent=0
    #allocation2 [shape = 'u8[2048]{0}', space=vmem, size = 0x800, scoped, tag = 'input window, operand 0']
    #allocation3 [shape = 's32[2]{0}', space=sflag, size = 0x8, scoped, tag = 'scoped memory for tpu_custom_call.1']
    #allocation4 [shape = 's32[2]{0}', space=sflag, size = 0x8, scoped, tag = 'scoped memory for tpu_custom_call.1']
    #allocation5 [shape = 'u8[2048]{0}', space=vmem, size = 0x800, scoped, tag = 'output window, operand 0']
    %7 = vsyncpa [#allocation3], 0
    %s8 = scalar_lea.sflag [#allocation3], 1
    %9 = vsyncpa %s8, 0
    %10 = vsyncpa [#allocation4], 0
    %s11 = scalar_lea.sflag [#allocation4], 1
    %12 = vsyncpa %s11, 0
    loop: start=0, step=1, limit=4
    $region2: #{tpu_custom_call.1} parent=1 // loop_pre_header
      _
    $region3: #{tpu_custom_call.1} parent=1 // loop_header
      %s14 = sphi 0, %s18
      %p15 = scmp.ge.s32.totalorder %s14, 4
      %s24 = sphi 0, %s26
      %s27 = sphi 0, %s24
      %s28 = sphi 0, %s27
      %s44 = sphi 0, %s28
      %s50 = sphi 0, %s52
      %s53 = sphi 0, %s50
      %s54 = sphi 0, %s53
      %s70 = sphi 0, %s54
      %s76 = sphi 0, %s78
      %s79 = sphi 0, %s76
      %s80 = sphi 0, %s79
      %s96 = sphi 0, %s80
    $region4: #{tpu_custom_call.1} parent=1 // loop_header_branch
      %17 = sbr.rel (%p15) target = $region8
    $region5: #{tpu_custom_call.1} parent=1 // loop_body
      %s19 = ssub.s32 %s14, 1
      %s20 = ssub.s32 %s14, 2
      %s21 = sadd.s32 %s14, 1
      %s22 = ssub.s32 %s14, %s21
      %p23 = scmp.eq.s32.totalorder %s22, 0
      %s25 = sadd.s32 %s24, 1
      %s26 = scalar_select %p23, %s24, %s25
      %p29 = pneg %p23
      %p30 = scmp.eq.s32.totalorder %s14, 1
      %p31 = por %p29, %p30
      %p32 = scmp.ne.s32.totalorder %s24, %s27
      %p33 = scmp.eq.s32.totalorder %s14, 0
      %p34 = por %p32, %p33
      %p35 = scmp.ne.s32.totalorder %s24, %s27
      %p36 = scmp.eq.s32.totalorder %s19, 1
      %p37 = por %p35, %p36
      %p38 = scmp.ne.s32.totalorder %s27, %s28
      %p39 = scmp.eq.s32.totalorder %s19, 0
      %p40 = por %p38, %p39
      %p41 = scmp.ne.s32.totalorder %s27, %s28
      %p42 = scmp.eq.s32.totalorder %s20, 1
      %p43 = por %p41, %p42
      %p45 = scmp.ne.s32.totalorder %s28, %s44
      %p46 = scmp.eq.s32.totalorder %s20, 0
      %p47 = por %p45, %p46
      %s48 = ssub.s32 %s14, %s21
      %p49 = scmp.eq.s32.totalorder %s48, 0
      %s51 = sadd.s32 %s50, 1
      %s52 = scalar_select %p49, %s50, %s51
      %p55 = pneg %p49
      %p56 = scmp.eq.s32.totalorder %s14, 1
      %p57 = por %p55, %p56
      %p58 = scmp.ne.s32.totalorder %s50, %s53
      %p59 = scmp.eq.s32.totalorder %s14, 0
      %p60 = por %p58, %p59
      %p61 = scmp.ne.s32.totalorder %s50, %s53
      %p62 = scmp.eq.s32.totalorder %s19, 1
      %p63 = por %p61, %p62
      %p64 = scmp.ne.s32.totalorder %s53, %s54
      %p65 = scmp.eq.s32.totalorder %s19, 0
      %p66 = por %p64, %p65
      %p67 = scmp.ne.s32.totalorder %s53, %s54
      %p68 = scmp.eq.s32.totalorder %s20, 1
      %p69 = por %p67, %p68
      %p71 = scmp.ne.s32.totalorder %s54, %s70
      %p72 = scmp.eq.s32.totalorder %s20, 0
      %p73 = por %p71, %p72
      %s74 = ssub.s32 %s14, %s21
      %p75 = scmp.eq.s32.totalorder %s74, 0
      %s77 = sadd.s32 %s76, 1
      %s78 = scalar_select %p75, %s76, %s77
      %p81 = pneg %p75
      %p82 = scmp.eq.s32.totalorder %s14, 1
      %p83 = por %p81, %p82
      %p84 = scmp.ne.s32.totalorder %s76, %s79
      %p85 = scmp.eq.s32.totalorder %s14, 0
      %p86 = por %p84, %p85
      %p87 = scmp.ne.s32.totalorder %s76, %s79
      %p88 = scmp.eq.s32.totalorder %s19, 1
      %p89 = por %p87, %p88
      %p90 = scmp.ne.s32.totalorder %s79, %s80
      %p91 = scmp.eq.s32.totalorder %s19, 0
      %p92 = por %p90, %p91
      %p93 = scmp.ne.s32.totalorder %s79, %s80
      %p94 = scmp.eq.s32.totalorder %s20, 1
      %p95 = por %p93, %p94
      %p97 = scmp.ne.s32.totalorder %s80, %s96
      %p98 = scmp.eq.s32.totalorder %s20, 0
      %p99 = por %p97, %p98
      %p100 = scmp.le.s32.totalorder 1, %s14
      %p101 = scmp.lt.s32.totalorder %s14, 3
      %p102 = pnand %p100, %p101
      %p103 = pneg %p102
      // Predicated region
      $region9: #{tpu_custom_call.1} parent=5 // pred_check
        _
      $region10: #{tpu_custom_call.1} parent=5 // pred_check_branch
        %105 = sbr.rel (%p102) target = $region12
      $region11: #{tpu_custom_call.1} parent=5 // pred_region
        %s106 = ssub.s32 %s14, 1
      $region12: #{tpu_custom_call.1} parent=5 // pred_fallthru
        _
      %p107 = scmp.lt.s32.totalorder %s14, 2
      // Predicated region
      $region13: #{tpu_custom_call.1} parent=5 // pred_check
        %p108 = pneg %p107
      $region14: #{tpu_custom_call.1} parent=5 // pred_check_branch
        %110 = sbr.rel (%p108) target = $region16
      $region15: #{tpu_custom_call.1} parent=5 // pred_region
        // Predicated region
        $region17: #{tpu_custom_call.1} parent=15 // pred_check
          %p111 = pneg %p34
        $region18: #{tpu_custom_call.1} parent=15 // pred_check_branch
          %113 = sbr.rel (%p111) target = $region20
        $region19: #{tpu_custom_call.1} parent=15 // pred_region
          %s114 = sand.u32 %s24, 1
          %s115 = scalar_lea.sflag [#allocation3], %s114
          %s116 = sand.u32 %s24, 1
          %s117 = smul.addr %s116, 2
          %s118 = scalar_lea.vmem [#allocation2], %s117
          %s120 = ssub.s32 32, 32
          %121 = vsyncadd %s115, %s120
          %s122 = smul.addr %s14, 32
          %s123 = scalar_lea.hbm %s0, %s122
          %s125 = sshll.u32 %s118, 4
          %s126 = int_to_ptr.vmem [resolvable:$true] %s125
          %128 = dma.hbm_to_vmem [thread:$0]  %s123, 32, %s126, %s115
        $region20: #{tpu_custom_call.1} parent=15 // pred_fallthru
          _
        // Predicated region
        $region21: #{tpu_custom_call.1} parent=15 // pred_check
          %p129 = pneg %p60
        $region22: #{tpu_custom_call.1} parent=15 // pred_check_branch
          %131 = sbr.rel (%p129) target = $region24
        $region23: #{tpu_custom_call.1} parent=15 // pred_region
          %p132 = scmp.lt.s32.totalorder %s14, 1
          %s133 = scalar_select %p132, %s14, 1
          %s134 = scalar_lea.vmem %s1, %s133
        $region24: #{tpu_custom_call.1} parent=15 // pred_fallthru
          _
      $region16: #{tpu_custom_call.1} parent=5 // pred_fallthru
        _
      %p135 = scmp.le.s32.totalorder 1, %s14
      %p136 = scmp.lt.s32.totalorder %s14, 3
      %p137 = pnand %p135, %p136
      %p138 = pneg %p137
      // Predicated region
      $region25: #{tpu_custom_call.1} parent=5 // pred_check
        _
      $region26: #{tpu_custom_call.1} parent=5 // pred_check_branch
        %140 = sbr.rel (%p137) target = $region28
      $region27: #{tpu_custom_call.1} parent=5 // pred_region
        %s141 = ssub.s32 %s14, 1
        %s142 = sand.u32 %s27, 1
        %s143 = scalar_lea.sflag [#allocation3], %s142
        %s144 = sand.u32 %s27, 1
        %s145 = smul.addr %s144, 2
        %s146 = scalar_lea.vmem [#allocation2], %s145
        // Predicated region
        $region29: #{tpu_custom_call.1} parent=27 // pred_check
          %p147 = pneg %p40
        $region30: #{tpu_custom_call.1} parent=27 // pred_check_branch
          %149 = sbr.rel (%p147) target = $region32
        $region31: #{tpu_custom_call.1} parent=27 // pred_region
          %150 = dma.done %s143, 32
        $region32: #{tpu_custom_call.1} parent=27 // pred_fallthru
          _
        %s151 = sand.u32 %s27, 1
        %s152 = scalar_lea.sflag [#allocation3], %s151
        %s153 = sand.u32 %s27, 1
        %s154 = smul.addr %s153, 2
        %s155 = scalar_lea.vmem [#allocation2], %s154
        %p156 = pneg %p40
        %p157 = pneg %p37
        %p158 = scmp.lt.s32.totalorder %s19, 1
        %s159 = scalar_select %p158, %s19, 1
        %s160 = scalar_lea.vmem %s1, %s159
        %p161 = pneg %p66
        %p162 = pneg %p63
        %p163 = pneg %p92
        %p164 = pneg %p89
        %s165 = sand.u32 %s79, 1
        %s166 = scalar_lea.sflag [#allocation4], %s165
        %s167 = sand.u32 %s79, 1
        %s168 = smul.addr %s167, 2
        %s169 = scalar_lea.vmem [#allocation5], %s168
        %p170 = scmp.lt.s32.totalorder %s19, 1
        %s171 = scalar_select %p170, %s19, 1
        %s172 = scalar_lea.vmem %s1, %s171
        %v173 = vld [vmem:[%s146] sm:$0x3]
        %v174 = vld [vmem:[%s172] sm:$0x1]
        %v176 = vlaneseq
        %v177 = vshrl.u32 %v176, 7
        %v178 = vsub.s32 0, %v177
        %v179 = vrot.slane %v174, %v178
        %v181 = vadd.f32 %v173, %v179
        %182 = vst [vmem:[%s169] sm:$0x3] %v181
        %s183 = sand.u32 %s79, 1
        %s184 = scalar_lea.sflag [#allocation4], %s183
        %s185 = sand.u32 %s79, 1
        %s186 = smul.addr %s185, 2
        %s187 = scalar_lea.vmem [#allocation5], %s186
        // Predicated region
        $region33: #{tpu_custom_call.1} parent=27 // pred_check
          %p188 = pneg %p89
        $region34: #{tpu_custom_call.1} parent=27 // pred_check_branch
          %190 = sbr.rel (%p188) target = $region36
        $region35: #{tpu_custom_call.1} parent=27 // pred_region
          %s192 = ssub.s32 32, 32
          %193 = vsyncadd %s184, %s192
          %s194 = smul.addr %s19, 32
          %s195 = scalar_lea.hbm %s2, %s194
          %s197 = sshll.u32 %s187, 4
          %s198 = int_to_ptr.vmem [resolvable:$true] %s197
          %200 = dma.vmem_to_hbm [thread:$0]  %s198, 32, %s195, %s184
        $region36: #{tpu_custom_call.1} parent=27 // pred_fallthru
          _
      $region28: #{tpu_custom_call.1} parent=5 // pred_fallthru
        _
      %p201 = scmp.le.s32.totalorder 2, %s14
      // Predicated region
      $region37: #{tpu_custom_call.1} parent=5 // pred_check
        %p202 = pneg %p201
      $region38: #{tpu_custom_call.1} parent=5 // pred_check_branch
        %204 = sbr.rel (%p202) target = $region40
      $region39: #{tpu_custom_call.1} parent=5 // pred_region
        %s205 = ssub.s32 %s14, 2
        // Predicated region
        $region41: #{tpu_custom_call.1} parent=39 // pred_check
          %p206 = pneg %p95
        $region42: #{tpu_custom_call.1} parent=39 // pred_check_branch
          %208 = sbr.rel (%p206) target = $region44
        $region43: #{tpu_custom_call.1} parent=39 // pred_region
          %s209 = sand.u32 %s80, 1
          %s210 = scalar_lea.sflag [#allocation4], %s209
          %s211 = sand.u32 %s80, 1
          %s212 = smul.addr %s211, 2
          %s213 = scalar_lea.vmem [#allocation5], %s212
          %214 = dma.done %s210, 32
        $region44: #{tpu_custom_call.1} parent=39 // pred_fallthru
          _
      $region40: #{tpu_custom_call.1} parent=5 // pred_fallthru
        _
    $region6: #{tpu_custom_call.1} parent=1 // loop_footer
      %s18 = sadd.s32 1, %s14
    $region7: #{tpu_custom_call.1} parent=1 // loop_footer_branch
      %13 = sbr.rel target = $region3
    $region8: #{tpu_custom_call.1} parent=1 // loop_exit
      _
    %215 = vsyncpa [#allocation3], 1
    %s216 = scalar_lea.sflag [#allocation3], 1
    %217 = vsyncpa %s216, 1
    %218 = vsyncpa [#allocation4], 1
    %s219 = scalar_lea.sflag [#allocation4], 1
    %220 = vsyncpa %s219, 1

</llo_original>
